<compile_context>
chip_gen: v7x
topology: tpu7x:2x2x1
jax: 0.10.0
libtpu: 0.0.40
codegen_flags: <defaults>
</compile_context>

<pallas_src>
import functools
from typing import NamedTuple, Optional, Tuple

import jax
import jax.numpy as jnp
from jax.experimental import pallas as pl
from jax.experimental.pallas import tpu as pltpu


def _round_up(x, m):
    return ((x + m - 1) // m) * m


class PreparedMLP(NamedTuple):
    """Padded/cast parameters, produced once outside the per-call hot path."""
    flat: Tuple[jax.Array, ...]       # (w0, b0, w1, b1, ...) padded, in MXU-input dtype
    dims_p: Tuple[int, ...]           # padded feature dims [D0_p, ..., DL_p]
    out_features: int                 # true (unpadded) output width
    num_hidden: int                   # number of hidden (ReLU) layers
    compute_dtype: Optional[object]   # MXU input dtype (None -> f32 compute)


def prepare_mlp_params(params, num_hidden, *, compute_dtype=jnp.bfloat16):
    """Pad + cast weights/biases once (hoisted out of the forward hot path).

    params: list of (W (Din_l, Dout_l), b (1, Dout_l)) in f32.
    Padding policy:
      * contraction / intermediate dims: sublane alignment only (8 f32 / 16 bf16),
      * final output dim: multiple of 128 (lane-dense HBM store),
      * padded rows/cols are zeros -> contribute nothing to the dots.
    """
    dims = [params[0][0].shape[0]] + [w.shape[1] for (w, _) in params]
    kalign = 16 if compute_dtype == jnp.bfloat16 else 8
    dims_p = [_round_up(d, kalign) for d in dims]
    dims_p[-1] = _round_up(dims[-1], 128)

    store_dtype = compute_dtype if compute_dtype is not None else params[0][0].dtype
    flat = []
    for l, (w, b) in enumerate(params):
        din_p, dout_p = dims_p[l], dims_p[l + 1]
        wp = jnp.zeros((din_p, dout_p), store_dtype)
        wp = wp.at[: w.shape[0], : w.shape[1]].set(w.astype(store_dtype))
        bp = jnp.zeros((1, dout_p), store_dtype)
        bp = bp.at[:, : b.shape[1]].set(b.astype(store_dtype))
        flat += [wp, bp]
    return PreparedMLP(tuple(flat), tuple(dims_p), dims[-1], num_hidden, compute_dtype)


def _fused_mlp_kernel(x_ref, *refs, num_hidden, compute_dtype):
    """Fused [Linear -> ReLU -> Dropout(id)]*H -> Linear on one batch tile.

    refs = (w0, b0, w1, b1, ..., o_ref). Weights/biases are whole VMEM-resident arrays
    already in the MXU input dtype; intermediates stay in vregs/VMEM.
    """
    o_ref = refs[-1]
    wb = refs[:-1]
    n_layers = len(wb) // 2

    h = x_ref[...]                                    # (tm, D0_p), f32
    for l in range(n_layers):                         # static Python loop -> unrolled chain
        w = wb[2 * l][...]                            # (K_p, N_p), MXU input dtype
        b = wb[2 * l + 1][...]                        # (1, N_p)
        lhs = h.astype(compute_dtype) if compute_dtype is not None else h
        y = jnp.dot(lhs, w, preferred_element_type=jnp.float32)   # MXU, f32 accumulate
        y = y + b.astype(jnp.float32)
        if l < num_hidden:
            y = jnp.maximum(y, 0.0)                   # ReLU; Dropout(p) is identity in eval
        h = y
    o_ref[...] = h.astype(o_ref.dtype)


def mlp_block_forward(x, prepared: PreparedMLP, *, tm=None, vmem_limit_bytes=None):
    """x: (B, Din) f32; prepared: PreparedMLP. Returns (B, out_features)."""
    B, Din = x.shape
    flat, dims_p = prepared.flat, prepared.dims_p
    n_layers = len(flat) // 2
    assert Din <= dims_p[0]

    # Batch tile: whole padded batch for small B (grid=(1,)); 512-row tiles for large B.
    if tm is None:
        tm = min(512, _round_up(B, 8))
    tm = _round_up(tm, 8)
    Bp = _round_up(B, tm)

    # Only the activation is padded per call (weights were padded once at prep time).
    if Bp == B and dims_p[0] == Din:
        xp = x
    else:
        xp = jnp.zeros((Bp, dims_p[0]), x.dtype).at[:B, :Din].set(x)

    grid = (Bp // tm,)

    # Batch-tiled activation + lane-dense output; whole weights/biases resident in VMEM
    # (single copy, no per-step DMA, no double buffering).
    in_specs = [pl.BlockSpec((tm, dims_p[0]), lambda i: (i, 0))]
    in_specs += [pl.BlockSpec(memory_space=pltpu.MemorySpace.VMEM)] * len(flat)
    out_specs = pl.BlockSpec((tm, dims_p[-1]), lambda i: (i, 0))

    # Explicit VMEM budget (v7x: 64 MiB/TC physical, 32 MiB default scoped; v5e default 16 MiB).
    itemsize = jnp.dtype(x.dtype).itemsize
    bytes_wb = sum(int(a.size) * a.dtype.itemsize for a in flat)
    bytes_io = 2 * tm * (dims_p[0] + dims_p[-1]) * itemsize       # double-buffered x/out tiles
    bytes_act = 2 * tm * max(dims_p) * 4                          # intermediate headroom (f32)
    needed = bytes_wb + bytes_io + bytes_act
    if needed > (56 << 20):
        # TODO(synk): switch to the K/N-tiled streaming-weight path here instead of failing.
        raise NotImplementedError("MLP weights too large for VMEM-resident fused kernel")
    if vmem_limit_bytes is None:
        vmem_limit_bytes = int(min(max(4 * needed, 16 << 20), 64 << 20))

    flops = sum(2 * Bp * dims_p[l] * dims_p[l + 1] for l in range(n_layers))
    bytes_accessed = int(xp.size) * itemsize + bytes_wb + Bp * dims_p[-1] * itemsize

    kernel = functools.partial(
        _fused_mlp_kernel,
        num_hidden=prepared.num_hidden,
        compute_dtype=prepared.compute_dtype,
    )

    out_p = pl.pallas_call(
        kernel,
        out_shape=jax.ShapeDtypeStruct((Bp, dims_p[-1]), x.dtype),
        grid=grid,
        in_specs=in_specs,
        out_specs=out_specs,
        compiler_params=pltpu.CompilerParams(
            # On v7x the batch grid is shardable across the two TensorCores; each core keeps
            # its own VMEM-resident copy of the (small) weights.
            dimension_semantics=("parallel",),
            vmem_limit_bytes=vmem_limit_bytes,
        ),
        cost_estimate=pl.CostEstimate(
            flops=int(flops), transcendentals=0, bytes_accessed=int(bytes_accessed)
        ),
    )(xp, *flat)

    # Slice the lane-dense padded output slab back to the true (B, out_features).
    return out_p[:B, : prepared.out_features]


def init_mlp_params(key, input_size, hidden_sizes, output_size, dtype=jnp.float32):
    """Deterministic PyTorch-Linear-style init: U(-1/sqrt(fan_in), 1/sqrt(fan_in))."""
    sizes = [input_size] + list(hidden_sizes)
    params = []
    for i in range(len(hidden_sizes)):
        key, kw, kb = jax.random.split(key, 3)
        bound = 1.0 / float(sizes[i]) ** 0.5
        w = jax.random.uniform(kw, (sizes[i], sizes[i + 1]), dtype, -bound, bound)
        b = jax.random.uniform(kb, (1, sizes[i + 1]), dtype, -bound, bound)
        params.append((w, b))
    if output_size:
        key, kw, kb = jax.random.split(key, 3)
        bound = 1.0 / float(sizes[-1]) ** 0.5
        w = jax.random.uniform(kw, (sizes[-1], output_size), dtype, -bound, bound)
        b = jax.random.uniform(kb, (1, output_size), dtype, -bound, bound)
        params.append((w, b))
    return params


if __name__ == "__main__":
    # Small shapes consistent with the module: batch=64, input=16, hidden=[32, 48], output=8.
    batch = 64
    input_size = 16
    hidden_sizes = [32, 48]
    output_size = 8

    key = jax.random.PRNGKey(0)
    key, kx = jax.random.split(key)
    x = jax.random.normal(kx, (batch, input_size), dtype=jnp.float32)

    params = init_mlp_params(key, input_size, hidden_sizes, output_size)
    num_hidden = len(hidden_sizes)

    # Plain-JAX reference (eval mode: dropout = identity).
    ref = x
    for idx, (w, b) in enumerate(params):
        ref = ref @ w + b
        if idx < num_hidden:
            ref = jnp.maximum(ref, 0.0)

    # Default fast path: bf16 MXU inputs, f32 accumulation; whole batch in one grid step.
    prep_bf16 = prepare_mlp_params(params, num_hidden, compute_dtype=jnp.bfloat16)
    out_bf16 = jax.block_until_ready(mlp_block_forward(x, prep_bf16))
    assert out_bf16.shape == (batch, output_size)
    assert jnp.allclose(out_bf16, ref, atol=5e-2, rtol=5e-2)

    # Exact-parity f32 path (matches PyTorch eval-mode numerics).
    prep_f32 = prepare_mlp_params(params, num_hidden, compute_dtype=None)
    out_f32 = jax.block_until_ready(mlp_block_forward(x, prep_f32))
    assert out_f32.shape == (batch, output_size)
    assert jnp.allclose(out_f32, ref, atol=1e-5, rtol=1e-5)

    # Batch-tiled path (grid > 1) with ragged batch -> exercises batch padding + slicing.
    batch2 = 100
    key, kx2 = jax.random.split(key)
    x2 = jax.random.normal(kx2, (batch2, input_size), dtype=jnp.float32)
    ref2 = x2
    for idx, (w, b) in enumerate(params):
        ref2 = ref2 @ w + b
        if idx < num_hidden:
            ref2 = jnp.maximum(ref2, 0.0)
    out2 = jax.block_until_ready(mlp_block_forward(x2, prep_f32, tm=64))
    assert out2.shape == (batch2, output_size)
    assert jnp.allclose(out2, ref2, atol=1e-5, rtol=1e-5)

    print("KERNEL_OK")
</pallas_src>

<mosaic_0001>
module attributes {stable_mosaic.version = 11 : i64} {
  func.func @_fused_mlp_kernel(%arg0: i32, %arg1: memref<64x16xf32, #tpu.memory_space<vmem>>, %arg2: memref<16x32xbf16, #tpu.memory_space<vmem>>, %arg3: memref<1x32xbf16, #tpu.memory_space<vmem>>, %arg4: memref<32x48xbf16, #tpu.memory_space<vmem>>, %arg5: memref<1x48xbf16, #tpu.memory_space<vmem>>, %arg6: memref<48x128xbf16, #tpu.memory_space<vmem>>, %arg7: memref<1x128xbf16, #tpu.memory_space<vmem>>, %arg8: memref<64x128xf32, #tpu.memory_space<vmem>>) attributes {dimension_semantics = [#tpu.dimension_semantics<parallel>], iteration_bounds = array<i64: 1>, scalar_prefetch = 0 : i64, scratch_operands = 0 : i64, tpu.core_type = #tpu.core_type<tc>, window_params = [{transform_indices = @transform_0, window_bounds = array<i64: 64, 16>}, {pipeline_mode = #tpu.pipeline_mode<synchronous>, transform_indices = @transform_1, window_bounds = array<i64: 16, 32>}, {pipeline_mode = #tpu.pipeline_mode<synchronous>, transform_indices = @transform_2, window_bounds = array<i64: 1, 32>}, {pipeline_mode = #tpu.pipeline_mode<synchronous>, transform_indices = @transform_3, window_bounds = array<i64: 32, 48>}, {pipeline_mode = #tpu.pipeline_mode<synchronous>, transform_indices = @transform_4, window_bounds = array<i64: 1, 48>}, {pipeline_mode = #tpu.pipeline_mode<synchronous>, transform_indices = @transform_5, window_bounds = array<i64: 48, 128>}, {pipeline_mode = #tpu.pipeline_mode<synchronous>, transform_indices = @transform_6, window_bounds = array<i64: 1, 128>}, {transform_indices = @transform_7, window_bounds = array<i64: 64, 128>}]} {
    %c0 = arith.constant 0 : index
    %c0_0 = arith.constant 0 : index
    %0 = vector.load %arg1[%c0, %c0_0] : memref<64x16xf32, #tpu.memory_space<vmem>>, vector<64x16xf32>
    %c0_1 = arith.constant 0 : index
    %c0_2 = arith.constant 0 : index
    %1 = vector.load %arg2[%c0_1, %c0_2] : memref<16x32xbf16, #tpu.memory_space<vmem>>, vector<16x32xbf16>
    %c0_3 = arith.constant 0 : index
    %c0_4 = arith.constant 0 : index
    %2 = vector.load %arg3[%c0_3, %c0_4] : memref<1x32xbf16, #tpu.memory_space<vmem>>, vector<1x32xbf16>
    %3 = arith.truncf %0 : vector<64x16xf32> to vector<64x16xbf16>
    %cst = arith.constant dense<0.000000e+00> : vector<64x32xf32>
    %4 = tpu.matmul %3, %1, %cst {dimension_numbers = #tpu.dot_dimension_numbers<[1], [0], [0], [1], [0, 0, 1, 1], [], []>} : vector<64x16xbf16>, vector<16x32xbf16>, vector<64x32xf32> -> vector<64x32xf32>
    %5 = arith.extf %2 : vector<1x32xbf16> to vector<1x32xf32>
    %6 = vector.broadcast %5 : vector<1x32xf32> to vector<64x32xf32>
    %7 = arith.addf %4, %6 : vector<64x32xf32>
    %cst_5 = arith.constant 0.000000e+00 : f32
    %8 = vector.broadcast %cst_5 : f32 to vector<64x32xf32>
    %9 = arith.maximumf %7, %8 : vector<64x32xf32>
    %c0_6 = arith.constant 0 : index
    %c0_7 = arith.constant 0 : index
    %10 = vector.load %arg4[%c0_6, %c0_7] : memref<32x48xbf16, #tpu.memory_space<vmem>>, vector<32x48xbf16>
    %c0_8 = arith.constant 0 : index
    %c0_9 = arith.constant 0 : index
    %11 = vector.load %arg5[%c0_8, %c0_9] : memref<1x48xbf16, #tpu.memory_space<vmem>>, vector<1x48xbf16>
    %12 = arith.truncf %9 : vector<64x32xf32> to vector<64x32xbf16>
    %cst_10 = arith.constant dense<0.000000e+00> : vector<64x48xf32>
    %13 = tpu.matmul %12, %10, %cst_10 {dimension_numbers = #tpu.dot_dimension_numbers<[1], [0], [0], [1], [0, 0, 1, 1], [], []>} : vector<64x32xbf16>, vector<32x48xbf16>, vector<64x48xf32> -> vector<64x48xf32>
    %14 = arith.extf %11 : vector<1x48xbf16> to vector<1x48xf32>
    %15 = vector.broadcast %14 : vector<1x48xf32> to vector<64x48xf32>
    %16 = arith.addf %13, %15 : vector<64x48xf32>
    %cst_11 = arith.constant 0.000000e+00 : f32
    %17 = vector.broadcast %cst_11 : f32 to vector<64x48xf32>
    %18 = arith.maximumf %16, %17 : vector<64x48xf32>
    %c0_12 = arith.constant 0 : index
    %c0_13 = arith.constant 0 : index
    %19 = vector.load %arg6[%c0_12, %c0_13] : memref<48x128xbf16, #tpu.memory_space<vmem>>, vector<48x128xbf16>
    %c0_14 = arith.constant 0 : index
    %c0_15 = arith.constant 0 : index
    %20 = vector.load %arg7[%c0_14, %c0_15] : memref<1x128xbf16, #tpu.memory_space<vmem>>, vector<1x128xbf16>
    %21 = arith.truncf %18 : vector<64x48xf32> to vector<64x48xbf16>
    %cst_16 = arith.constant dense<0.000000e+00> : vector<64x128xf32>
    %22 = tpu.matmul %21, %19, %cst_16 {dimension_numbers = #tpu.dot_dimension_numbers<[1], [0], [0], [1], [0, 0, 1, 1], [], []>} : vector<64x48xbf16>, vector<48x128xbf16>, vector<64x128xf32> -> vector<64x128xf32>
    %23 = arith.extf %20 : vector<1x128xbf16> to vector<1x128xf32>
    %24 = vector.broadcast %23 : vector<1x128xf32> to vector<64x128xf32>
    %25 = arith.addf %22, %24 : vector<64x128xf32>
    %c0_17 = arith.constant 0 : index
    %c0_18 = arith.constant 0 : index
    %26 = vector.load %arg8[%c0_17, %c0_18] : memref<64x128xf32, #tpu.memory_space<vmem>>, vector<64x128xf32>
    tpu.vector_store %arg8[%c0_17, %c0_18], %25 {strides = array<i32>} : memref<64x128xf32, #tpu.memory_space<vmem>>, vector<64x128xf32>,
    return
  }
  func.func @transform_0(%arg0: i32) -> (i32, i32) {
    %c0_i32 = arith.constant 0 : i32
    %c0_i32_0 = arith.constant 0 : i32
    return %arg0, %c0_i32 : i32, i32
  }
  func.func @transform_1(%arg0: i32) -> (i32, i32) {
    %c0_i32 = arith.constant 0 : i32
    %c0_i32_0 = arith.constant 0 : i32
    %c0_i32_1 = arith.constant 0 : i32
    return %c0_i32, %c0_i32_0 : i32, i32
  }
  func.func @transform_2(%arg0: i32) -> (i32, i32) {
    %c0_i32 = arith.constant 0 : i32
    %c0_i32_0 = arith.constant 0 : i32
    %c0_i32_1 = arith.constant 0 : i32
    return %c0_i32, %c0_i32_0 : i32, i32
  }
  func.func @transform_3(%arg0: i32) -> (i32, i32) {
    %c0_i32 = arith.constant 0 : i32
    %c0_i32_0 = arith.constant 0 : i32
    %c0_i32_1 = arith.constant 0 : i32
    return %c0_i32, %c0_i32_0 : i32, i32
  }
  func.func @transform_4(%arg0: i32) -> (i32, i32) {
    %c0_i32 = arith.constant 0 : i32
    %c0_i32_0 = arith.constant 0 : i32
    %c0_i32_1 = arith.constant 0 : i32
    return %c0_i32, %c0_i32_0 : i32, i32
  }
  func.func @transform_5(%arg0: i32) -> (i32, i32) {
    %c0_i32 = arith.constant 0 : i32
    %c0_i32_0 = arith.constant 0 : i32
    %c0_i32_1 = arith.constant 0 : i32
    return %c0_i32, %c0_i32_0 : i32, i32
  }
  func.func @transform_6(%arg0: i32) -> (i32, i32) {
    %c0_i32 = arith.constant 0 : i32
    %c0_i32_0 = arith.constant 0 : i32
    %c0_i32_1 = arith.constant 0 : i32
    return %c0_i32, %c0_i32_0 : i32, i32
  }
  func.func @transform_7(%arg0: i32) -> (i32, i32) {
    %c0_i32 = arith.constant 0 : i32
    %c0_i32_0 = arith.constant 0 : i32
    return %arg0, %c0_i32 : i32, i32
  }
}

</mosaic_0001>

<llo_original>
// kernel: tpu_custom_call.1
$region0: #{tpu_custom_call.1}
  #allocation0 [shape = 'u32[]', space=smem, size = 0x4, offset = 0x4, fixed_abs, tag = 'smem constant byte address 0x4 - core index']
  #allocation1 [shape = 'u32[144,128]{1,0:T(1,128)}', space=vmem, size = 0x12000, scoped, tag = 'internal scratch']
  %s0 = inlined_call_operand.vmem [shape: f32[64,16], index: 0, kind: input, shape index: {}]
  %s1 = inlined_call_operand.vmem [shape: bf16[16,32], index: 1, kind: input, shape index: {}]
  %s2 = inlined_call_operand.vmem [shape: bf16[1,32], index: 2, kind: input, shape index: {}]
  %s3 = inlined_call_operand.vmem [shape: bf16[32,48], index: 3, kind: input, shape index: {}]
  %s4 = inlined_call_operand.vmem [shape: bf16[1,48], index: 4, kind: input, shape index: {}]
  %s5 = inlined_call_operand.vmem [shape: bf16[48,128], index: 5, kind: input, shape index: {}]
  %s6 = inlined_call_operand.vmem [shape: bf16[1,128], index: 6, kind: input, shape index: {}]
  %s7 = inlined_call_operand.hbm [shape: f32[64,128], index: 7, kind: output, shape index: {}]
  %s8 = sld [smem:[#allocation0]]
  $region38: #{tpu_custom_call.1} parent=0
    _
  %s10 = ssub.s32 1, %s8
  %s11 = scalar_select 0, %s10, %s8
  $region1: #{tpu_custom_call.1} parent=0
    #allocation2 [shape = 'u8[32768]{0}', space=vmem, size = 0x8000, scoped, tag = 'output window, operand 0, single buffered']
    #allocation3 [shape = 's32[1]{0}', space=sflag, size = 0x4, scoped, tag = 'scoped memory for tpu_custom_call.1']
    %12 = vsyncpa [#allocation3], 0
    // Predicated region
    $region2: #{tpu_custom_call.1} parent=1 // pred_check
      _
    $region3: #{tpu_custom_call.1} parent=1 // pred_check_branch
      %14 = sbr.rel (0) target = $region5
    $region4: #{tpu_custom_call.1} parent=1 // pred_region
      _
    $region5: #{tpu_custom_call.1} parent=1 // pred_fallthru
      _
    // Predicated region
    $region6: #{tpu_custom_call.1} parent=1 // pred_check
      _
    $region7: #{tpu_custom_call.1} parent=1 // pred_check_branch
      %16 = sbr.rel (0) target = $region9
    $region8: #{tpu_custom_call.1} parent=1 // pred_region
      _
    $region9: #{tpu_custom_call.1} parent=1 // pred_fallthru
      _
    // Predicated region
    $region10: #{tpu_custom_call.1} parent=1 // pred_check
      _
    $region11: #{tpu_custom_call.1} parent=1 // pred_check_branch
      %18 = sbr.rel (0) target = $region13
    $region12: #{tpu_custom_call.1} parent=1 // pred_region
      _
    $region13: #{tpu_custom_call.1} parent=1 // pred_fallthru
      _
    // Predicated region
    $region14: #{tpu_custom_call.1} parent=1 // pred_check
      _
    $region15: #{tpu_custom_call.1} parent=1 // pred_check_branch
      %20 = sbr.rel (0) target = $region17
    $region16: #{tpu_custom_call.1} parent=1 // pred_region
      _
    $region17: #{tpu_custom_call.1} parent=1 // pred_fallthru
      _
    // Predicated region
    $region18: #{tpu_custom_call.1} parent=1 // pred_check
      _
    $region19: #{tpu_custom_call.1} parent=1 // pred_check_branch
      %22 = sbr.rel (0) target = $region21
    $region20: #{tpu_custom_call.1} parent=1 // pred_region
      _
    $region21: #{tpu_custom_call.1} parent=1 // pred_fallthru
      _
    // Predicated region
    $region22: #{tpu_custom_call.1} parent=1 // pred_check
      _
    $region23: #{tpu_custom_call.1} parent=1 // pred_check_branch
      %24 = sbr.rel (0) target = $region25
    $region24: #{tpu_custom_call.1} parent=1 // pred_region
      _
    $region25: #{tpu_custom_call.1} parent=1 // pred_fallthru
      _
    // Predicated region
    $region26: #{tpu_custom_call.1} parent=1 // pred_check
      _
    $region27: #{tpu_custom_call.1} parent=1 // pred_check_branch
      %26 = sbr.rel (0) target = $region29
    $region28: #{tpu_custom_call.1} parent=1 // pred_region
      _
    $region29: #{tpu_custom_call.1} parent=1 // pred_fallthru
      _
    %v28 = vld [vmem:[%s0] sm:$0xff]
    %v29 = vld [vmem:[%s0 + $0x8] sm:$0xff]
    %v30 = vld [vmem:[%s0 + $0x10] sm:$0xff]
    %v31 = vld [vmem:[%s0 + $0x18] sm:$0xff]
    %v32 = vld [vmem:[%s0 + $0x20] sm:$0xff]
    %v33 = vld [vmem:[%s0 + $0x28] sm:$0xff]
    %v34 = vld [vmem:[%s0 + $0x30] sm:$0xff]
    %v35 = vld [vmem:[%s0 + $0x38] sm:$0xff]
    %v36 = vld [vmem:[%s1] sm:$0xf]
    %v37 = vld [vmem:[%s1 + $0x4] sm:$0xf]
    %v38 = vld [vmem:[%s2] sm:$0x1]
    %v39 = vpack.c.bf16 %v29, %v28
    %v40 = vpack.c.bf16 %v31, %v30
    %v41 = vpack.c.bf16 %v33, %v32
    %v42 = vpack.c.bf16 %v35, %v34
    %v43 = vunpack.c.l.bf16 %v38
    %v44 = vlaneseq
    %v45 = vshrl.u32 %v44, 7
    %v46 = vsub.s32 0, %v45
    %v47 = vrot.slane %v43, %v46
    %v50 = vunpack.c.l.b16 %v36
    %v51 = vunpack.c.l.b16 %v37
    %v52 = vpack.c.b16 %v51, %v50
    %vm54 = vcmask 130048
    %v56 = vsel %vm54, %v39, 0
    %v59 = vsel %vm54, %v40, 0
    %v62 = vsel %vm54, %v41, 0
    %v65 = vsel %vm54, %v42, 0
    %67 = vmatprep.subr.bf16.mxu0 0
    %68 = vmatpush1.bf16.msra.mxu0 %v52
    %69 = vmatprep.subr.bf16.mxu0 0
    %70 = vmatpush1.bf16.msra.mxu0 0
    %71 = vmatprep.subr.bf16.mxu0 0
    %72 = vmatpush1.bf16.msra.mxu0 0
    %73 = vmatprep.subr.bf16.mxu0 0
    %74 = vmatpush1.bf16.msra.mxu0 0
    %75 = vmatprep.subr.bf16.mxu0 0
    %76 = vmatpush1.bf16.msra.mxu0 0
    %77 = vmatprep.subr.bf16.mxu0 0
    %78 = vmatpush1.bf16.msra.mxu0 0
    %79 = vmatprep.subr.bf16.mxu0 0
    %80 = vmatpush1.bf16.msra.mxu0 0
    %81 = vmatprep.subr.bf16.mxu0 0
    %82 = vmatpush1.bf16.msra.mxu0 0
    %83 = vmatprep.subr.bf16.mxu0 0
    %84 = vmatpush1.bf16.msra.mxu0 0
    %85 = vmatprep.subr.bf16.mxu0 0
    %86 = vmatpush1.bf16.msra.mxu0 0
    %87 = vmatprep.subr.bf16.mxu0 0
    %88 = vmatpush1.bf16.msra.mxu0 0
    %89 = vmatprep.subr.bf16.mxu0 0
    %90 = vmatpush1.bf16.msra.mxu0 0
    %91 = vmatprep.subr.bf16.mxu0 0
    %92 = vmatpush1.bf16.msra.mxu0 0
    %93 = vmatprep.subr.bf16.mxu0 0
    %94 = vmatpush1.bf16.msra.mxu0 0
    %95 = vmatprep.subr.bf16.mxu0 0
    %96 = vmatpush1.bf16.msra.mxu0 0
    %97 = vmatprep.subr.bf16.mxu0 0
    %98 = vmatpush1.bf16.msra.mxu0 0
    %99 = vmatprep.mubr.bf16.mxu0 0
    %100 = vmatmul.mubr.bf16.gmra.mrb[0].mxu0 %v56
    %v101 = vpop.f32.mrb[0].mxu0
    %v102 = vadd.f32 %v47, %v101
    %v103 = vpop.f32.mrb[0].mxu0
    %v104 = vpop.f32.mrb[0].mxu0
    %v105 = vadd.f32 %v47, %v104
    %v106 = vpop.f32.mrb[0].mxu0
    %107 = vmatprep.mubr.bf16.mxu0 0
    %108 = vmatmul.mubr.bf16.gmra.mrb[0].mxu0 %v59
    %v109 = vpop.f32.mrb[0].mxu0
    %v110 = vadd.f32 %v47, %v109
    %v111 = vpop.f32.mrb[0].mxu0
    %v112 = vpop.f32.mrb[0].mxu0
    %v113 = vadd.f32 %v47, %v112
    %v114 = vpop.f32.mrb[0].mxu0
    %115 = vmatprep.mubr.bf16.mxu0 0
    %116 = vmatmul.mubr.bf16.gmra.mrb[0].mxu0 %v62
    %v117 = vpop.f32.mrb[0].mxu0
    %v118 = vadd.f32 %v47, %v117
    %v119 = vpop.f32.mrb[0].mxu0
    %v120 = vpop.f32.mrb[0].mxu0
    %v121 = vadd.f32 %v47, %v120
    %v122 = vpop.f32.mrb[0].mxu0
    %123 = vmatprep.mubr.bf16.mxu0 0
    %124 = vmatmul.mubr.bf16.gmra.mrb[0].mxu0 %v65
    %v125 = vpop.f32.mrb[0].mxu0
    %v126 = vadd.f32 %v47, %v125
    %v127 = vpop.f32.mrb[0].mxu0
    %v128 = vpop.f32.mrb[0].mxu0
    %v129 = vadd.f32 %v47, %v128
    %v130 = vpop.f32.mrb[0].mxu0
    %131 = vdwg.mxu0
    %v132 = vmax.f32 %v102, 0.0
    %v133 = vmax.f32 %v105, 0.0
    %v134 = vmax.f32 %v110, 0.0
    %v135 = vmax.f32 %v113, 0.0
    %v136 = vmax.f32 %v118, 0.0
    %v137 = vmax.f32 %v121, 0.0
    %v138 = vmax.f32 %v126, 0.0
    %v139 = vmax.f32 %v129, 0.0
    %v140 = vld [vmem:[%s3] sm:$0xf]
    %v141 = vld [vmem:[%s3 + $0x4] sm:$0xf]
    %v142 = vld [vmem:[%s3 + $0x8] sm:$0xf]
    %v143 = vld [vmem:[%s3 + $0xc] sm:$0xf]
    %v144 = vld [vmem:[%s4] sm:$0x1]
    %v145 = vpack.c.bf16 %v133, %v132
    %v146 = vpack.c.bf16 %v135, %v134
    %v147 = vpack.c.bf16 %v137, %v136
    %v148 = vpack.c.bf16 %v139, %v138
    %v149 = vunpack.c.l.bf16 %v144
    %v150 = vlaneseq
    %v151 = vshrl.u32 %v150, 7
    %v152 = vsub.s32 0, %v151
    %v153 = vrot.slane %v149, %v152
    %v158 = vunpack.c.l.b16 %v140
    %v159 = vunpack.c.l.b16 %v141
    %v160 = vunpack.c.l.b16 %v142
    %v161 = vunpack.c.l.b16 %v143
    %v162 = vpack.c.b16 %v159, %v158
    %v163 = vpack.c.b16 %v161, %v160
    %vm166 = vcmask 261120
    %v168 = vsel %vm166, %v145, 0
    %v171 = vsel %vm166, %v146, 0
    %v174 = vsel %vm166, %v147, 0
    %v177 = vsel %vm166, %v148, 0
    %179 = vmatprep.subr.bf16.mxu0 0
    %180 = vmatpush1.bf16.msra.mxu0 %v162
    %181 = vmatprep.subr.bf16.mxu0 0
    %182 = vmatpush1.bf16.msra.mxu0 %v163
    %183 = vmatprep.subr.bf16.mxu0 0
    %184 = vmatpush1.bf16.msra.mxu0 0
    %185 = vmatprep.subr.bf16.mxu0 0
    %186 = vmatpush1.bf16.msra.mxu0 0
    %187 = vmatprep.subr.bf16.mxu0 0
    %188 = vmatpush1.bf16.msra.mxu0 0
    %189 = vmatprep.subr.bf16.mxu0 0
    %190 = vmatpush1.bf16.msra.mxu0 0
    %191 = vmatprep.subr.bf16.mxu0 0
    %192 = vmatpush1.bf16.msra.mxu0 0
    %193 = vmatprep.subr.bf16.mxu0 0
    %194 = vmatpush1.bf16.msra.mxu0 0
    %195 = vmatprep.subr.bf16.mxu0 0
    %196 = vmatpush1.bf16.msra.mxu0 0
    %197 = vmatprep.subr.bf16.mxu0 0
    %198 = vmatpush1.bf16.msra.mxu0 0
    %199 = vmatprep.subr.bf16.mxu0 0
    %200 = vmatpush1.bf16.msra.mxu0 0
    %201 = vmatprep.subr.bf16.mxu0 0
    %202 = vmatpush1.bf16.msra.mxu0 0
    %203 = vmatprep.subr.bf16.mxu0 0
    %204 = vmatpush1.bf16.msra.mxu0 0
    %205 = vmatprep.subr.bf16.mxu0 0
    %206 = vmatpush1.bf16.msra.mxu0 0
    %207 = vmatprep.subr.bf16.mxu0 0
    %208 = vmatpush1.bf16.msra.mxu0 0
    %209 = vmatprep.subr.bf16.mxu0 0
    %210 = vmatpush1.bf16.msra.mxu0 0
    %211 = vmatprep.mubr.bf16.mxu0 0
    %212 = vmatmul.mubr.bf16.gmra.mrb[0].mxu0 %v168
    %v213 = vpop.f32.mrb[0].mxu0
    %v214 = vadd.f32 %v153, %v213
    %v215 = vpop.f32.mrb[0].mxu0
    %v216 = vpop.f32.mrb[0].mxu0
    %v217 = vadd.f32 %v153, %v216
    %v218 = vpop.f32.mrb[0].mxu0
    %219 = vmatprep.mubr.bf16.mxu0 0
    %220 = vmatmul.mubr.bf16.gmra.mrb[0].mxu0 %v171
    %v221 = vpop.f32.mrb[0].mxu0
    %v222 = vadd.f32 %v153, %v221
    %v223 = vpop.f32.mrb[0].mxu0
    %v224 = vpop.f32.mrb[0].mxu0
    %v225 = vadd.f32 %v153, %v224
    %v226 = vpop.f32.mrb[0].mxu0
    %227 = vmatprep.mubr.bf16.mxu0 0
    %228 = vmatmul.mubr.bf16.gmra.mrb[0].mxu0 %v174
    %v229 = vpop.f32.mrb[0].mxu0
    %v230 = vadd.f32 %v153, %v229
    %v231 = vpop.f32.mrb[0].mxu0
    %v232 = vpop.f32.mrb[0].mxu0
    %v233 = vadd.f32 %v153, %v232
    %v234 = vpop.f32.mrb[0].mxu0
    %235 = vmatprep.mubr.bf16.mxu0 0
    %236 = vmatmul.mubr.bf16.gmra.mrb[0].mxu0 %v177
    %v237 = vpop.f32.mrb[0].mxu0
    %v238 = vadd.f32 %v153, %v237
    %v239 = vpop.f32.mrb[0].mxu0
    %v240 = vpop.f32.mrb[0].mxu0
    %v241 = vadd.f32 %v153, %v240
    %v242 = vpop.f32.mrb[0].mxu0
    %243 = vdwg.mxu0
    %v244 = vmax.f32 %v214, 0.0
    %v245 = vmax.f32 %v217, 0.0
    %v246 = vmax.f32 %v222, 0.0
    %v247 = vmax.f32 %v225, 0.0
    %v248 = vmax.f32 %v230, 0.0
    %v249 = vmax.f32 %v233, 0.0
    %v250 = vmax.f32 %v238, 0.0
    %v251 = vmax.f32 %v241, 0.0
    %v252 = vld [vmem:[%s5] sm:$0xf]
    %v253 = vld [vmem:[%s5 + $0x4] sm:$0xf]
    %v254 = vld [vmem:[%s5 + $0x8] sm:$0xf]
    %v255 = vld [vmem:[%s5 + $0xc] sm:$0xf]
    %v256 = vld [vmem:[%s5 + $0x10] sm:$0xf]
    %v257 = vld [vmem:[%s5 + $0x14] sm:$0xf]
    %v258 = vld [vmem:[%s6] sm:$0x1]
    %v259 = vpack.c.bf16 %v245, %v244
    %v260 = vpack.c.bf16 %v247, %v246
    %v261 = vpack.c.bf16 %v249, %v248
    %v262 = vpack.c.bf16 %v251, %v250
    %v263 = vunpack.c.l.bf16 %v258
    %v264 = vlaneseq
    %v265 = vshrl.u32 %v264, 7
    %v266 = vsub.s32 0, %v265
    %v267 = vrot.slane %v263, %v266
    %v274 = vunpack.c.l.b16 %v252
    %v275 = vunpack.c.l.b16 %v253
    %v276 = vunpack.c.l.b16 %v254
    %v277 = vunpack.c.l.b16 %v255
    %v278 = vunpack.c.l.b16 %v256
    %v279 = vunpack.c.l.b16 %v257
    %v280 = vpack.c.b16 %v275, %v274
    %v281 = vpack.c.b16 %v277, %v276
    %v282 = vpack.c.b16 %v279, %v278
    %vm286 = vcmask 392192
    %v288 = vsel %vm286, %v259, 0
    %v291 = vsel %vm286, %v260, 0
    %v294 = vsel %vm286, %v261, 0
    %v297 = vsel %vm286, %v262, 0
    %299 = vmatprep.subr.bf16.mxu0 0
    %300 = vmatpush1.bf16.msra.mxu0 %v280
    %301 = vmatprep.subr.bf16.mxu0 0
    %302 = vmatpush1.bf16.msra.mxu0 %v281
    %303 = vmatprep.subr.bf16.mxu0 0
    %304 = vmatpush1.bf16.msra.mxu0 %v282
    %305 = vmatprep.subr.bf16.mxu0 0
    %306 = vmatpush1.bf16.msra.mxu0 0
    %307 = vmatprep.subr.bf16.mxu0 0
    %308 = vmatpush1.bf16.msra.mxu0 0
    %309 = vmatprep.subr.bf16.mxu0 0
    %310 = vmatpush1.bf16.msra.mxu0 0
    %311 = vmatprep.subr.bf16.mxu0 0
    %312 = vmatpush1.bf16.msra.mxu0 0
    %313 = vmatprep.subr.bf16.mxu0 0
    %314 = vmatpush1.bf16.msra.mxu0 0
    %315 = vmatprep.subr.bf16.mxu0 0
    %316 = vmatpush1.bf16.msra.mxu0 0
    %317 = vmatprep.subr.bf16.mxu0 0
    %318 = vmatpush1.bf16.msra.mxu0 0
    %319 = vmatprep.subr.bf16.mxu0 0
    %320 = vmatpush1.bf16.msra.mxu0 0
    %321 = vmatprep.subr.bf16.mxu0 0
    %322 = vmatpush1.bf16.msra.mxu0 0
    %323 = vmatprep.subr.bf16.mxu0 0
    %324 = vmatpush1.bf16.msra.mxu0 0
    %325 = vmatprep.subr.bf16.mxu0 0
    %326 = vmatpush1.bf16.msra.mxu0 0
    %327 = vmatprep.subr.bf16.mxu0 0
    %328 = vmatpush1.bf16.msra.mxu0 0
    %329 = vmatprep.subr.bf16.mxu0 0
    %330 = vmatpush1.bf16.msra.mxu0 0
    %331 = vmatprep.mubr.bf16.mxu0 0
    %332 = vmatmul.mubr.bf16.gmra.mrb[0].mxu0 %v288
    %v333 = vpop.f32.mrb[0].mxu0
    %v334 = vadd.f32 %v267, %v333
    %v335 = vpop.f32.mrb[0].mxu0
    %v336 = vpop.f32.mrb[0].mxu0
    %v337 = vadd.f32 %v267, %v336
    %v338 = vpop.f32.mrb[0].mxu0
    %339 = vmatprep.mubr.bf16.mxu0 0
    %340 = vmatmul.mubr.bf16.gmra.mrb[0].mxu0 %v291
    %v341 = vpop.f32.mrb[0].mxu0
    %v342 = vadd.f32 %v267, %v341
    %v343 = vpop.f32.mrb[0].mxu0
    %v344 = vpop.f32.mrb[0].mxu0
    %v345 = vadd.f32 %v267, %v344
    %v346 = vpop.f32.mrb[0].mxu0
    %347 = vmatprep.mubr.bf16.mxu0 0
    %348 = vmatmul.mubr.bf16.gmra.mrb[0].mxu0 %v294
    %v349 = vpop.f32.mrb[0].mxu0
    %v350 = vadd.f32 %v267, %v349
    %v351 = vpop.f32.mrb[0].mxu0
    %v352 = vpop.f32.mrb[0].mxu0
    %v353 = vadd.f32 %v267, %v352
    %v354 = vpop.f32.mrb[0].mxu0
    %355 = vmatprep.mubr.bf16.mxu0 0
    %356 = vmatmul.mubr.bf16.gmra.mrb[0].mxu0 %v297
    %v357 = vpop.f32.mrb[0].mxu0
    %v358 = vadd.f32 %v267, %v357
    %v359 = vpop.f32.mrb[0].mxu0
    %v360 = vpop.f32.mrb[0].mxu0
    %v361 = vadd.f32 %v267, %v360
    %v362 = vpop.f32.mrb[0].mxu0
    %363 = vdwg.mxu0
    %364 = vst [vmem:[#allocation2] sm:$0xff] %v334
    %365 = vst [vmem:[#allocation2 + $0x8] sm:$0xff] %v337
    %366 = vst [vmem:[#allocation2 + $0x10] sm:$0xff] %v342
    %367 = vst [vmem:[#allocation2 + $0x18] sm:$0xff] %v345
    %368 = vst [vmem:[#allocation2 + $0x20] sm:$0xff] %v350
    %369 = vst [vmem:[#allocation2 + $0x28] sm:$0xff] %v353
    %370 = vst [vmem:[#allocation2 + $0x30] sm:$0xff] %v358
    %371 = vst [vmem:[#allocation2 + $0x38] sm:$0xff] %v361
    // Predicated region
    $region30: #{tpu_custom_call.1} parent=1 // pred_check
      _
    $region31: #{tpu_custom_call.1} parent=1 // pred_check_branch
      %373 = sbr.rel (0) target = $region33
    $region32: #{tpu_custom_call.1} parent=1 // pred_region
      %s375 = ssub.s32 1024, 1024
      %376 = vsyncadd [#allocation3], %s375
      %s377 = sshll.u32 [#allocation2], 4
      %s378 = int_to_ptr.vmem [resolvable:$true] %s377
      %383 = dma.vmem_to_hbm [thread:$0]  %s378, 1024, %s7, [#allocation3], 128, 128, 8
    $region33: #{tpu_custom_call.1} parent=1 // pred_fallthru
      _
    // Predicated region
    $region34: #{tpu_custom_call.1} parent=1 // pred_check
      _
    $region35: #{tpu_custom_call.1} parent=1 // pred_check_branch
      %385 = sbr.rel (0) target = $region37
    $region36: #{tpu_custom_call.1} parent=1 // pred_region
      %386 = dma.done [#allocation3], 1024
    $region37: #{tpu_custom_call.1} parent=1 // pred_fallthru
      _
    %387 = vsyncpa [#allocation3], 1

</llo_original>
